<compile_context>
chip_gen: v7x
topology: tpu7x:2x2x1
jax: 0.10.0
libtpu: 0.0.40
codegen_flags: <defaults>
</compile_context>

<pallas_src>
import functools
import math

import jax
import jax.numpy as jnp
from jax.experimental import pallas as pl
from jax.experimental.pallas import tpu as pltpu


def _round_up(a, b):
    return (a + b - 1) // b * b


def _label_smoothing_kernel(x_ref, tgt_ref, out_ref, acc_ref, *,
                            smooth_val, confidence, padding_idx,
                            c_entropy, vocab_size, block_cols, needs_col_mask):
    """One (row-tile, vocab-tile) grid step.

    Folds this vocab tile's  sum_v td*x  contribution (per row, lane-dense)
    into acc_ref.  On the last vocab tile the cross-lane reduce, row mask,
    sign flip and entropy constant are applied and out_ref is written once.
    """
    j = pl.program_id(1)
    n_j = pl.num_programs(1)
    tn = acc_ref.shape[0]
    tv = block_cols
    n_chunks = tv // 128

    tgt = tgt_ref[...]                         # (tn, 1) int32
    tgt_local = tgt - j * tv                   # (tn, 1) target col, tile-local
    rem = vocab_size - j * tv                  # scalar: # valid cols this tile

    @pl.when(j == 0)
    def _():
        acc_ref[...] = jnp.zeros_like(acc_ref)

    def fold(mask_cols):
        iota128 = jax.lax.broadcasted_iota(jnp.int32, (tn, 128), 1)
        acc = acc_ref[...]                     # (tn, 128)
        for g in range(n_chunks):
            xg = x_ref[:, g * 128:(g + 1) * 128].astype(jnp.float32)
            if mask_cols:
                # Mask x itself (select) so OOB garbage/NaN cannot leak.
                xg = jnp.where(iota128 < rem - g * 128, xg, jnp.float32(0.0))
            w = jnp.where(iota128 == tgt_local - g * 128,
                          jnp.float32(confidence), jnp.float32(smooth_val))
            acc = acc + w * xg
        acc_ref[...] = acc

    if needs_col_mask:
        # Only the last vocab tile is ragged; keep the fast path unmasked.
        @pl.when(j != n_j - 1)
        def _():
            fold(False)

        @pl.when(j == n_j - 1)
        def _():
            fold(True)
    else:
        fold(False)

    # Reference zeroes column `padding_idx` after the scatter; for kept rows
    # that column held smooth_val, so subtract its (single, static) column
    # contribution once, on the tile that contains it.
    j_pad = padding_idx // tv
    pad_local = padding_idx % tv

    @pl.when(j == j_pad)
    def _():
        xp = x_ref[:, pad_local:pad_local + 1].astype(jnp.float32)   # (tn, 1)
        acc_ref[:, 0:1] = acc_ref[:, 0:1] - jnp.float32(smooth_val) * xp

    # Finalize: one XLU reduce per row tile, write the output block once.
    @pl.when(j == n_j - 1)
    def _():
        total = jnp.sum(acc_ref[...], axis=1, keepdims=True)         # (tn, 1)
        row_keep = tgt != padding_idx
        out_ref[...] = jnp.where(row_keep,
                                 jnp.float32(c_entropy) - total,
                                 jnp.float32(0.0))


def label_smoothing_loss(x, target, *, size, padding_idx, smoothing=0.0,
                         block_rows=256, block_cols=8192):
    """Pallas implementation of LabelSmoothing.forward.

    x:      (N, size) float32/bfloat16 log-probabilities
    target: (N,)      int labels
    returns scalar float32 loss (sum-reduced KL divergence).
    """
    n, v = x.shape
    assert v == size
    # Matches the reference's (size - 2) divisor; size == 2 would divide by 0.
    assert size > 2, "LabelSmoothing requires size > 2"

    confidence = 1.0 - smoothing
    smooth_val = smoothing / (size - 2)
    c_logc = confidence * math.log(confidence) if confidence > 0.0 else 0.0
    s_logs = smooth_val * math.log(smooth_val) if smooth_val > 0.0 else 0.0
    c_entropy = c_logc + (size - 2) * s_logs   # sum_v td*log(td) for kept rows

    x_bytes = jnp.dtype(x.dtype).itemsize

    # Lane/sublane-aligned tile sizes.
    tv = min(_round_up(v, 128), _round_up(block_cols, 128))
    tn = min(_round_up(n, 8), _round_up(block_rows, 8))
    # Keep double-buffered x tiles comfortably inside scoped VMEM on all gens.
    while 2 * tn * tv * x_bytes > 40 * 1024 * 1024 and tv > 512:
        tv = _round_up(tv // 2, 128)
    n_pad = _round_up(n, tn)
    # v7x: prefer >= 2 row tiles so the "parallel" axis can use both TCs.
    while n_pad // tn < 2 and tn > 8:
        tn = max(8, _round_up(tn // 2, 8))
        n_pad = _round_up(n, tn)

    v_tiles = pl.cdiv(v, tv)
    needs_col_mask = (v % tv) != 0

    # Only the target gets padded (tiny: N int32s). Padded rows get
    # target == padding_idx so row_keep zeroes them; x is NOT padded.
    tgt = target.astype(jnp.int32)
    if n_pad != n:
        tgt = jnp.pad(tgt, (0, n_pad - n), constant_values=padding_idx)
    tgt2d = tgt.reshape(n_pad, 1)

    grid = (n_pad // tn, v_tiles)
    kernel = functools.partial(
        _label_smoothing_kernel,
        smooth_val=smooth_val, confidence=confidence, padding_idx=padding_idx,
        c_entropy=c_entropy, vocab_size=v, block_cols=tv,
        needs_col_mask=needs_col_mask)

    # Double-buffered x tiles + small tgt/out/acc buffers, capped so the
    # limit stays safe on v7x's 64 MiB-per-TC physical VMEM.
    vmem_limit = int(min(max(2 * tn * tv * x_bytes + (4 << 20), 32 << 20),
                         48 << 20))

    per_row = pl.pallas_call(
        kernel,
        out_shape=jax.ShapeDtypeStruct((n_pad, 1), jnp.float32),
        grid_spec=pltpu.PrefetchScalarGridSpec(
            num_scalar_prefetch=0,
            grid=grid,
            in_specs=[
                pl.BlockSpec((tn, tv), lambda i, j: (i, j)),
                pl.BlockSpec((tn, 1), lambda i, j: (i, 0)),
            ],
            out_specs=pl.BlockSpec((tn, 1), lambda i, j: (i, 0)),
            scratch_shapes=[pltpu.VMEM((tn, 128), jnp.float32)],
        ),
        compiler_params=pltpu.CompilerParams(
            dimension_semantics=("parallel", "arbitrary"),
            vmem_limit_bytes=vmem_limit),
        cost_estimate=pl.CostEstimate(
            flops=4 * n * v,
            transcendentals=0,
            bytes_accessed=n * v * x_bytes + 2 * n_pad * 4),
    )(x, tgt2d)

    # Tiny final reduction over per-row losses (padded rows are exactly 0).
    return jnp.sum(per_row)


def _reference_loss(x, target, *, size, padding_idx, smoothing):
    """Pure-JAX reference for sanity checking (mirrors the PyTorch module)."""
    n, v = x.shape
    confidence = 1.0 - smoothing
    col = jnp.arange(v)[None, :]
    tgt = target[:, None]
    td = jnp.full((n, v), smoothing / (v - 2), jnp.float32)
    td = jnp.where(col == tgt, confidence, td)
    td = jnp.where(col == padding_idx, 0.0, td)
    td = jnp.where(tgt == padding_idx, 0.0, td)
    xlogy = jnp.where(td > 0, td * jnp.log(jnp.where(td > 0, td, 1.0)), 0.0)
    return jnp.sum(xlogy - td * x.astype(jnp.float32))


if __name__ == "__main__":
    key = jax.random.PRNGKey(0)
    SMOOTHING = 0.1

    # Case 1: toy shape, single tile, ragged vocab (32 < 128), padding_idx=0.
    N, SIZE, PAD = 8, 32, 0
    k1, k2, key = jax.random.split(key, 3)
    x1 = jax.nn.log_softmax(jax.random.normal(k1, (N, SIZE), jnp.float32), -1)
    t1 = jax.random.randint(k2, (N,), 0, SIZE, dtype=jnp.int32)
    t1 = t1.at[1].set(PAD)                     # exercise the row-zeroing path
    loss1 = jax.block_until_ready(
        label_smoothing_loss(x1, t1, size=SIZE, padding_idx=PAD,
                             smoothing=SMOOTHING))
    ref1 = _reference_loss(x1, t1, size=SIZE, padding_idx=PAD,
                           smoothing=SMOOTHING)
    assert jnp.allclose(loss1, ref1, rtol=1e-5, atol=1e-4), (loss1, ref1)

    # Case 2: ragged rows AND vocab on a multi-tile grid, padding_idx in a
    # non-first vocab tile (exercises the static pad-column correction, the
    # vocab-axis accumulator, the masked last vocab tile and row padding).
    N2, SIZE2, PAD2 = 21, 300, 133
    k3, k4, key = jax.random.split(key, 3)
    x2 = jax.nn.log_softmax(jax.random.normal(k3, (N2, SIZE2), jnp.float32), -1)
    t2 = jax.random.randint(k4, (N2,), 0, SIZE2, dtype=jnp.int32)
    t2 = t2.at[3].set(PAD2)
    loss2 = jax.block_until_ready(
        label_smoothing_loss(x2, t2, size=SIZE2, padding_idx=PAD2,
                             smoothing=SMOOTHING,
                             block_rows=8, block_cols=128))
    ref2 = _reference_loss(x2, t2, size=SIZE2, padding_idx=PAD2,
                           smoothing=SMOOTHING)
    assert jnp.allclose(loss2, ref2, rtol=1e-5, atol=1e-4), (loss2, ref2)

    # Case 3: bf16 fast path (half the HBM bytes), aligned vocab, 2 row tiles.
    N3, SIZE3, PAD3 = 16, 1024, 0
    k5, k6, _ = jax.random.split(key, 3)
    x3 = jax.nn.log_softmax(
        jax.random.normal(k5, (N3, SIZE3), jnp.float32), -1).astype(jnp.bfloat16)
    t3 = jax.random.randint(k6, (N3,), 0, SIZE3, dtype=jnp.int32)
    t3 = t3.at[0].set(PAD3)
    loss3 = jax.block_until_ready(
        label_smoothing_loss(x3, t3, size=SIZE3, padding_idx=PAD3,
                             smoothing=SMOOTHING))
    ref3 = _reference_loss(x3, t3, size=SIZE3, padding_idx=PAD3,
                           smoothing=SMOOTHING)
    assert jnp.allclose(loss3, ref3, rtol=1e-3, atol=1e-3), (loss3, ref3)

    print("KERNEL_OK")
</pallas_src>

<mosaic_0001>
module attributes {stable_mosaic.version = 11 : i64} {
  func.func @_label_smoothing_kernel(%arg0: i32, %arg1: i32, %arg2: memref<8x128xf32, #tpu.memory_space<vmem>>, %arg3: memref<8x1xi32, #tpu.memory_space<vmem>>, %arg4: memref<8x1xf32, #tpu.memory_space<vmem>>, %arg5: memref<8x128xf32, #tpu.memory_space<vmem>>) attributes {dimension_semantics = [#tpu.dimension_semantics<parallel>, #tpu.dimension_semantics<arbitrary>], iteration_bounds = array<i64: 1, 1>, scalar_prefetch = 0 : i64, scratch_operands = 1 : i64, tpu.core_type = #tpu.core_type<tc>, window_params = [{transform_indices = @transform_0, window_bounds = array<i64: 8, 128>}, {transform_indices = @transform_1, window_bounds = array<i64: 8, 1>}, {transform_indices = @transform_2, window_bounds = array<i64: 8, 1>}]} {
    %c0 = arith.constant 0 : index
    %c0_0 = arith.constant 0 : index
    %0 = vector.load %arg3[%c0, %c0_0] : memref<8x1xi32, #tpu.memory_space<vmem>>, vector<8x1xi32>
    %c128_i32 = arith.constant 128 : i32
    %1 = arith.muli %arg1, %c128_i32 : i32
    %2 = vector.broadcast %1 : i32 to vector<8x1xi32>
    %3 = arith.subi %0, %2 : vector<8x1xi32>
    %c128_i32_1 = arith.constant 128 : i32
    %4 = arith.muli %arg1, %c128_i32_1 : i32
    %c32_i32 = arith.constant 32 : i32
    %5 = arith.subi %c32_i32, %4 : i32
    %c0_i32 = arith.constant 0 : i32
    %6 = arith.cmpi eq, %arg1, %c0_i32 : i32
    %7 = arith.extui %6 : i1 to i32
    %c0_i32_2 = arith.constant 0 : i32
    %8 = arith.cmpi ne, %7, %c0_i32_2 : i32
    scf.if %8 {
      %cst = arith.constant 0.000000e+00 : f32
      %21 = vector.broadcast %cst : f32 to vector<8x128xf32>
      %c0_11 = arith.constant 0 : index
      %c0_12 = arith.constant 0 : index
      %22 = vector.load %arg5[%c0_11, %c0_12] : memref<8x128xf32, #tpu.memory_space<vmem>>, vector<8x128xf32>
      tpu.vector_store %arg5[%c0_11, %c0_12], %21 {strides = array<i32>} : memref<8x128xf32, #tpu.memory_space<vmem>>, vector<8x128xf32>,
    } else {
    }
    %c0_i32_3 = arith.constant 0 : i32
    %9 = arith.cmpi ne, %arg1, %c0_i32_3 : i32
    %10 = arith.extui %9 : i1 to i32
    %c0_i32_4 = arith.constant 0 : i32
    %11 = arith.cmpi ne, %10, %c0_i32_4 : i32
    scf.if %11 {
      %21 = tpu.iota {dimensions = array<i32: 1>} : vector<8x128xi32>
      %c0_11 = arith.constant 0 : index
      %c0_12 = arith.constant 0 : index
      %22 = vector.load %arg5[%c0_11, %c0_12] : memref<8x128xf32, #tpu.memory_space<vmem>>, vector<8x128xf32>
      %c0_13 = arith.constant 0 : index
      %c0_14 = arith.constant 0 : index
      %23 = vector.load %arg2[%c0_13, %c0_14] : memref<8x128xf32, #tpu.memory_space<vmem>>, vector<8x128xf32>
      %c0_i32_15 = arith.constant 0 : i32
      %24 = vector.broadcast %c0_i32_15 : i32 to vector<8x1xi32>
      %25 = arith.subi %3, %24 : vector<8x1xi32>
      %26 = vector.broadcast %25 : vector<8x1xi32> to vector<8x128xi32>
      %27 = arith.cmpi eq, %21, %26 : vector<8x128xi32>
      %cst = arith.constant 0.899999976 : f32
      %cst_16 = arith.constant 0.00333333341 : f32
      %28 = vector.broadcast %cst : f32 to vector<8x128xf32>
      %29 = vector.broadcast %cst_16 : f32 to vector<8x128xf32>
      %30 = arith.select %27, %28, %29 : vector<8x128xi1>, vector<8x128xf32>
      %31 = arith.mulf %30, %23 : vector<8x128xf32>
      %32 = arith.addf %22, %31 : vector<8x128xf32>
      %c0_17 = arith.constant 0 : index
      %c0_18 = arith.constant 0 : index
      %33 = vector.load %arg5[%c0_17, %c0_18] : memref<8x128xf32, #tpu.memory_space<vmem>>, vector<8x128xf32>
      tpu.vector_store %arg5[%c0_17, %c0_18], %32 {strides = array<i32>} : memref<8x128xf32, #tpu.memory_space<vmem>>, vector<8x128xf32>,
    } else {
    }
    %c0_i32_5 = arith.constant 0 : i32
    %12 = arith.cmpi eq, %arg1, %c0_i32_5 : i32
    %13 = arith.extui %12 : i1 to i32
    %c0_i32_6 = arith.constant 0 : i32
    %14 = arith.cmpi ne, %13, %c0_i32_6 : i32
    scf.if %14 {
      %21 = tpu.iota {dimensions = array<i32: 1>} : vector<8x128xi32>
      %c0_11 = arith.constant 0 : index
      %c0_12 = arith.constant 0 : index
      %22 = vector.load %arg5[%c0_11, %c0_12] : memref<8x128xf32, #tpu.memory_space<vmem>>, vector<8x128xf32>
      %c0_13 = arith.constant 0 : index
      %c0_14 = arith.constant 0 : index
      %23 = vector.load %arg2[%c0_13, %c0_14] : memref<8x128xf32, #tpu.memory_space<vmem>>, vector<8x128xf32>
      %c0_i32_15 = arith.constant 0 : i32
      %24 = arith.subi %5, %c0_i32_15 : i32
      %25 = vector.broadcast %24 : i32 to vector<8x128xi32>
      %26 = arith.cmpi slt, %21, %25 : vector<8x128xi32>
      %cst = arith.constant 0.000000e+00 : f32
      %27 = vector.broadcast %cst : f32 to vector<8x128xf32>
      %28 = arith.select %26, %23, %27 : vector<8x128xi1>, vector<8x128xf32>
      %c0_i32_16 = arith.constant 0 : i32
      %29 = vector.broadcast %c0_i32_16 : i32 to vector<8x1xi32>
      %30 = arith.subi %3, %29 : vector<8x1xi32>
      %31 = vector.broadcast %30 : vector<8x1xi32> to vector<8x128xi32>
      %32 = arith.cmpi eq, %21, %31 : vector<8x128xi32>
      %cst_17 = arith.constant 0.899999976 : f32
      %cst_18 = arith.constant 0.00333333341 : f32
      %33 = vector.broadcast %cst_17 : f32 to vector<8x128xf32>
      %34 = vector.broadcast %cst_18 : f32 to vector<8x128xf32>
      %35 = arith.select %32, %33, %34 : vector<8x128xi1>, vector<8x128xf32>
      %36 = arith.mulf %35, %28 : vector<8x128xf32>
      %37 = arith.addf %22, %36 : vector<8x128xf32>
      %c0_19 = arith.constant 0 : index
      %c0_20 = arith.constant 0 : index
      %38 = vector.load %arg5[%c0_19, %c0_20] : memref<8x128xf32, #tpu.memory_space<vmem>>, vector<8x128xf32>
      tpu.vector_store %arg5[%c0_19, %c0_20], %37 {strides = array<i32>} : memref<8x128xf32, #tpu.memory_space<vmem>>, vector<8x128xf32>,
    } else {
    }
    %c0_i32_7 = arith.constant 0 : i32
    %15 = arith.cmpi eq, %arg1, %c0_i32_7 : i32
    %16 = arith.extui %15 : i1 to i32
    %c0_i32_8 = arith.constant 0 : i32
    %17 = arith.cmpi ne, %16, %c0_i32_8 : i32
    scf.if %17 {
      %c0_11 = arith.constant 0 : index
      %c0_12 = arith.constant 0 : index
      %21 = vector.load %arg2[%c0_11, %c0_12] : memref<8x128xf32, #tpu.memory_space<vmem>>, vector<8x1xf32>
      %c0_13 = arith.constant 0 : index
      %c0_14 = arith.constant 0 : index
      %22 = vector.load %arg5[%c0_13, %c0_14] : memref<8x128xf32, #tpu.memory_space<vmem>>, vector<8x1xf32>
      %cst = arith.constant 0.00333333341 : f32
      %23 = vector.broadcast %cst : f32 to vector<8x1xf32>
      %24 = arith.mulf %23, %21 : vector<8x1xf32>
      %25 = arith.subf %22, %24 : vector<8x1xf32>
      %c0_15 = arith.constant 0 : index
      %c0_16 = arith.constant 0 : index
      %26 = vector.load %arg5[%c0_15, %c0_16] : memref<8x128xf32, #tpu.memory_space<vmem>>, vector<8x1xf32>
      tpu.vector_store %arg5[%c0_15, %c0_16], %25 {strides = array<i32>} : memref<8x128xf32, #tpu.memory_space<vmem>>, vector<8x1xf32>,
    } else {
    }
    %c0_i32_9 = arith.constant 0 : i32
    %18 = arith.cmpi eq, %arg1, %c0_i32_9 : i32
    %19 = arith.extui %18 : i1 to i32
    %c0_i32_10 = arith.constant 0 : i32
    %20 = arith.cmpi ne, %19, %c0_i32_10 : i32
    scf.if %20 {
      %c0_11 = arith.constant 0 : index
      %c0_12 = arith.constant 0 : index
      %21 = vector.load %arg5[%c0_11, %c0_12] : memref<8x128xf32, #tpu.memory_space<vmem>>, vector<8x128xf32>
      %cst = arith.constant dense<0.000000e+00> : vector<8xf32>
      %22 = vector.multi_reduction <add>, %21, %cst [1] : vector<8x128xf32> to vector<8xf32>
      %23 = vector.shape_cast %22 : vector<8xf32> to vector<8x1xf32>
      %c0_i32_13 = arith.constant 0 : i32
      %24 = vector.broadcast %c0_i32_13 : i32 to vector<8x1xi32>
      %25 = arith.cmpi ne, %0, %24 : vector<8x1xi32>
      %cst_14 = arith.constant -0.665202737 : f32
      %26 = vector.broadcast %cst_14 : f32 to vector<8x1xf32>
      %27 = arith.subf %26, %23 : vector<8x1xf32>
      %cst_15 = arith.constant 0.000000e+00 : f32
      %28 = vector.broadcast %cst_15 : f32 to vector<8x1xf32>
      %29 = arith.select %25, %27, %28 : vector<8x1xi1>, vector<8x1xf32>
      %c0_16 = arith.constant 0 : index
      %c0_17 = arith.constant 0 : index
      %30 = vector.load %arg4[%c0_16, %c0_17] : memref<8x1xf32, #tpu.memory_space<vmem>>, vector<8x1xf32>
      tpu.vector_store %arg4[%c0_16, %c0_17], %29 {strides = array<i32>} : memref<8x1xf32, #tpu.memory_space<vmem>>, vector<8x1xf32>,
    } else {
    }
    return
  }
  func.func @transform_0(%arg0: i32, %arg1: i32) -> (i32, i32) {
    %c0_i32 = arith.constant 0 : i32
    return %arg0, %arg1 : i32, i32
  }
  func.func @transform_1(%arg0: i32, %arg1: i32) -> (i32, i32) {
    %c0_i32 = arith.constant 0 : i32
    %c0_i32_0 = arith.constant 0 : i32
    return %arg0, %c0_i32 : i32, i32
  }
  func.func @transform_2(%arg0: i32, %arg1: i32) -> (i32, i32) {
    %c0_i32 = arith.constant 0 : i32
    %c0_i32_0 = arith.constant 0 : i32
    return %arg0, %c0_i32 : i32, i32
  }
}

</mosaic_0001>

<llo_original>
// kernel: tpu_custom_call.1
$region0: #{tpu_custom_call.1}
  #allocation0 [shape = 'u32[]', space=smem, size = 0x4, offset = 0x4, fixed_abs, tag = 'smem constant byte address 0x4 - core index']
  #allocation1 [shape = 'u32[144,128]{1,0:T(1,128)}', space=vmem, size = 0x12000, scoped, tag = 'internal scratch']
  #allocation2 [shape = 'f32[8,128]{1,0:T(8,128)}', space=vmem, size = 0x1000, scoped, tag = 'scratch operand']
  %s0 = inlined_call_operand.vmem [shape: f32[8,32], index: 0, kind: input, shape index: {}]
  %s1 = inlined_call_operand.vmem [shape: s32[8,1], index: 1, kind: input, shape index: {}]
  %s2 = inlined_call_operand.vmem [shape: f32[8,1], index: 2, kind: output, shape index: {}]
  %s3 = sld [smem:[#allocation0]]
  $region30: #{tpu_custom_call.1} parent=0
    _
  %s5 = ssub.s32 1, %s3
  %s6 = scalar_select 0, %s5, %s3
  // Predicated region
  $region2: #{tpu_custom_call.1} parent=0 // pred_check
    _
  $region3: #{tpu_custom_call.1} parent=0 // pred_check_branch
    %8 = sbr.rel (0) target = $region5
  $region4: #{tpu_custom_call.1} parent=0 // pred_region
    _
  $region5: #{tpu_custom_call.1} parent=0 // pred_fallthru
    _
  // Predicated region
  $region6: #{tpu_custom_call.1} parent=0 // pred_check
    _
  $region7: #{tpu_custom_call.1} parent=0 // pred_check_branch
    %10 = sbr.rel (0) target = $region9
  $region8: #{tpu_custom_call.1} parent=0 // pred_region
    _
  $region9: #{tpu_custom_call.1} parent=0 // pred_fallthru
    _
  %v11 = vld [vmem:[%s1] sm:$0xff]
  %s12 = smul.u32 0, 128
  %v13 = vstv %s12
  %v14 = vsub.s32 %v11, %v13
  %s15 = ssub.s32 32, %s12
  %p16 = scmp.eq.s32.totalorder 0, 0
  // Predicated region
  $region10: #{tpu_custom_call.1} parent=0 // pred_check
    %p17 = pneg %p16
  $region11: #{tpu_custom_call.1} parent=0 // pred_check_branch
    %19 = sbr.rel (%p17) target = $region13
  $region12: #{tpu_custom_call.1} parent=0 // pred_region
    %20 = vst [vmem:[#allocation2] sm:$0xff] 0.0
  $region13: #{tpu_custom_call.1} parent=0 // pred_fallthru
    _
  %p21 = scmp.ne.s32.totalorder 0, 0
  // Predicated region
  $region14: #{tpu_custom_call.1} parent=0 // pred_check
    %p22 = pneg %p21
  $region15: #{tpu_custom_call.1} parent=0 // pred_check_branch
    %24 = sbr.rel (%p22) target = $region17
  $region16: #{tpu_custom_call.1} parent=0 // pred_region
    %v25 = vlaneseq
    %v26 = vand.u32 %v25, 127
    %v27 = vld [vmem:[#allocation2] sm:$0xff]
    %v28 = vld [vmem:[%s0] sm:$0xff]
    %29 = vset.pattern.permute.xlu0 0
    %30 = vperm.xlu0 %29, %v14
    %v31 = vpop.permute.xlu0 %30
    %vm32 = vcmp.eq.s32.totalorder %v26, %v31
    %v33 = vsel %vm32, 0.9, 0.0033333334
    %v34 = vmul.f32 %v33, %v28
    %v35 = vadd.f32 %v27, %v34
    %36 = vst [vmem:[#allocation2] sm:$0xff] %v35
  $region17: #{tpu_custom_call.1} parent=0 // pred_fallthru
    _
  // Predicated region
  $region18: #{tpu_custom_call.1} parent=0 // pred_check
    %p37 = pneg %p16
  $region19: #{tpu_custom_call.1} parent=0 // pred_check_branch
    %39 = sbr.rel (%p37) target = $region21
  $region20: #{tpu_custom_call.1} parent=0 // pred_region
    %v40 = vlaneseq
    %v41 = vand.u32 %v40, 127
    %v42 = vld [vmem:[#allocation2] sm:$0xff]
    %v43 = vld [vmem:[%s0] sm:$0xff]
    %v44 = vstv %s15
    %vm45 = vcmp.lt.s32.totalorder %v41, %v44
    %v46 = vsel %vm45, %v43, 0.0
    %47 = vset.pattern.permute.xlu0 0
    %48 = vperm.xlu0 %47, %v14
    %v49 = vpop.permute.xlu0 %48
    %vm50 = vcmp.eq.s32.totalorder %v41, %v49
    %v51 = vsel %vm50, 0.9, 0.0033333334
    %v52 = vmul.f32 %v51, %v46
    %v53 = vadd.f32 %v42, %v52
    %54 = vst [vmem:[#allocation2] sm:$0xff] %v53
    %v55 = vld [vmem:[%s0] sm:$0xff]
    %v56 = vld [vmem:[#allocation2] sm:$0xff]
    %v57 = vmul.f32 %v55, 0.0033333334
    %v58 = vsub.f32 %v56, %v57
    %vm59 = vcmask 7168
    %60 = vst.msk [vmem:[#allocation2] sm:$0xff] %vm59, %v58
    %v61 = vld [vmem:[#allocation2] sm:$0xff]
    %62 = vadd.xlane.f32.xlu0 %v61
    %v63 = vpop.xlane.xlu0 %62
    %vm64 = vcmp.ne.s32.totalorder %v11, 0
    %v65 = vsub.f32 -0.66520274, %v63
    %v66 = vsel %vm64, %v65, 0.0
    %67 = vst.msk [vmem:[%s2] sm:$0xff] %vm59, %v66
  $region21: #{tpu_custom_call.1} parent=0 // pred_fallthru
    _
  // Predicated region
  $region22: #{tpu_custom_call.1} parent=0 // pred_check
    _
  $region23: #{tpu_custom_call.1} parent=0 // pred_check_branch
    %69 = sbr.rel (0) target = $region25
  $region24: #{tpu_custom_call.1} parent=0 // pred_region
    _
  $region25: #{tpu_custom_call.1} parent=0 // pred_fallthru
    _
  // Predicated region
  $region26: #{tpu_custom_call.1} parent=0 // pred_check
    _
  $region27: #{tpu_custom_call.1} parent=0 // pred_check_branch
    %71 = sbr.rel (0) target = $region29
  $region28: #{tpu_custom_call.1} parent=0 // pred_region
    _
  $region29: #{tpu_custom_call.1} parent=0 // pred_fallthru
    _

</llo_original>
